<compile_context>
chip_gen: v7x
topology: tpu7x:2x2x1
jax: 0.10.0
libtpu: 0.0.40
codegen_flags: <defaults>
</compile_context>

<pallas_src>
import functools

import jax
import jax.numpy as jnp
from jax.experimental import pallas as pl
from jax.experimental.pallas import tpu as pltpu

KNN = 24
BN_EPS = 1e-5        # PyTorch BatchNorm1d default eps
_TN_CAP = 256        # N-tile cap (rows per grid step)


def _pick_tile(n, cap=_TN_CAP):
    """Largest multiple-of-8 divisor of n that is <= cap (falls back to n)."""
    if n <= cap:
        return n
    for t in range(cap, 7, -8):
        if n % t == 0:
            return t
    return n


# --------------------------------------------------------------------------
# Kernel 1: inverse-distance-weighted k-NN feature interpolation (N-tiled)
# --------------------------------------------------------------------------
def _interp_kernel(xyz1_ref, xyz2t_ref, p2_ref, out_ref, *, knn):
    x1 = xyz1_ref[...]       # [TN, C]
    x2t = xyz2t_ref[...]     # [C, S]  (channels-first -> no in-kernel transpose)
    p2 = p2_ref[...]         # [S, D2]

    # Squared pairwise distances, clamped: the -2xy + |x|^2 + |y|^2 form can go
    # slightly negative for (near-)coincident points.
    d2 = -2.0 * jnp.dot(x1, x2t, preferred_element_type=jnp.float32)   # [TN, S]
    d2 = d2 + jnp.sum(x1 * x1, axis=1, keepdims=True)
    d2 = d2 + jnp.sum(x2t * x2t, axis=0, keepdims=True)
    d2 = jnp.maximum(d2, 0.0)

    tn = d2.shape[0]

    # Running k-th-smallest threshold per row: 1 XLU lane-reduction per iter.
    def body(_, carry):
        remaining, _thr = carry
        m = jnp.min(remaining, axis=1, keepdims=True)
        remaining = jnp.where(remaining <= m, jnp.inf, remaining)
        return remaining, m

    _, thr = jax.lax.fori_loop(0, knn, body,
                               (d2, jnp.zeros((tn, 1), jnp.float32)))

    # TODO(synk): exact ties at the threshold can add >knn neighbors (weights
    # renormalize, so this differs from torch.sort only on equal distances).
    sel = (d2 <= thr).astype(jnp.float32)

    # weight = 1/dist normalized over the selected set.  rsqrt / approx-recip
    # run on the EUP slot; 1e-16 under the sqrt matches 1/(dist + 1e-8) at d=0.
    recip = sel * jax.lax.rsqrt(d2 + 1e-16)
    norm = jnp.sum(recip, axis=1, keepdims=True)
    w = recip * pl.reciprocal(norm, approx=True)

    out_ref[...] = jnp.dot(w.astype(jnp.bfloat16), p2.astype(jnp.bfloat16),
                           preferred_element_type=jnp.float32)      # [TN, D2]


def interpolate(xyz1_t, xyz2_cf, p2_t, knn):
    B, N, C = xyz1_t.shape
    S = xyz2_cf.shape[2]
    D2 = p2_t.shape[2]
    tn = _pick_tile(N)
    return pl.pallas_call(
        functools.partial(_interp_kernel, knn=knn),
        out_shape=jax.ShapeDtypeStruct((B, N, D2), jnp.float32),
        grid=(B, N // tn),
        in_specs=[
            pl.BlockSpec((None, tn, C), lambda b, i: (b, i, 0)),
            pl.BlockSpec((None, C, S), lambda b, i: (b, 0, 0)),   # resident over N-tiles
            pl.BlockSpec((None, S, D2), lambda b, i: (b, 0, 0)),  # resident over N-tiles
        ],
        out_specs=pl.BlockSpec((None, tn, D2), lambda b, i: (b, i, 0)),
        compiler_params=pltpu.CompilerParams(
            dimension_semantics=("parallel", "parallel"),
            vmem_limit_bytes=48 * 1024 * 1024),
    )(xyz1_t, xyz2_cf, p2_t)


# --------------------------------------------------------------------------
# Kernel 2: [previous layer BN + ReLU] + 1x1 Conv1d + per-tile batch statistics
# --------------------------------------------------------------------------
def _fused_conv_kernel(x_ref, scale_ref, shift_ref, wt_ref, b_ref,
                       y_ref, stats_ref, *, apply_bn_relu):
    x = x_ref[...]                                            # [TN, Cin] f32
    if apply_bn_relu:
        # BatchNorm-apply + ReLU of the previous layer, fused into this conv.
        x = jnp.maximum(x * scale_ref[...] + shift_ref[...], 0.0)
    y = jnp.dot(x.astype(jnp.bfloat16), wt_ref[...].astype(jnp.bfloat16),
                preferred_element_type=jnp.float32) + b_ref[...]
    y_ref[...] = y                                            # [TN, Cout]
    # Per-(batch, N-tile) partial sums; reduced to BN stats in the wrapper.
    stats_ref[...] = jnp.concatenate(
        [jnp.sum(y, axis=0, keepdims=True),
         jnp.sum(y * y, axis=0, keepdims=True)], axis=0)      # one store, [2, Cout]


def conv_bn_relu_stats(x, scale2d, shift2d, wt, bias2d, apply_bn_relu):
    B, N, Cin = x.shape
    Cout = wt.shape[1]
    tn = _pick_tile(N)
    nt = N // tn
    return pl.pallas_call(
        functools.partial(_fused_conv_kernel, apply_bn_relu=apply_bn_relu),
        out_shape=(
            jax.ShapeDtypeStruct((B, N, Cout), jnp.float32),
            jax.ShapeDtypeStruct((B, nt, 2, Cout), jnp.float32),
        ),
        grid=(B, nt),
        in_specs=[
            pl.BlockSpec((None, tn, Cin), lambda b, i: (b, i, 0)),
            pl.BlockSpec((1, Cin), lambda b, i: (0, 0)),
            pl.BlockSpec((1, Cin), lambda b, i: (0, 0)),
            pl.BlockSpec((Cin, Cout), lambda b, i: (0, 0)),
            pl.BlockSpec((1, Cout), lambda b, i: (0, 0)),
        ],
        out_specs=(
            pl.BlockSpec((None, tn, Cout), lambda b, i: (b, i, 0)),
            pl.BlockSpec((None, None, 2, Cout), lambda b, i: (b, i, 0, 0)),
        ),
        compiler_params=pltpu.CompilerParams(
            dimension_semantics=("parallel", "parallel"),
            vmem_limit_bytes=32 * 1024 * 1024),
    )(x, scale2d, shift2d, wt, bias2d)


# --------------------------------------------------------------------------
# Kernel 3: last-layer BatchNorm apply + ReLU, fused with the channels-first
#           output transpose (N ends up on the lane axis)
# --------------------------------------------------------------------------
def _bn_relu_t_kernel(y_ref, scale_ref, shift_ref, o_ref):
    h = jnp.maximum(y_ref[...] * scale_ref[...] + shift_ref[...], 0.0)  # [TN, C]
    o_ref[...] = h.T                                                    # [C, TN]


def bn_relu_transpose(y, scale2d, shift2d):
    B, N, C = y.shape
    tn = _pick_tile(N)
    return pl.pallas_call(
        _bn_relu_t_kernel,
        out_shape=jax.ShapeDtypeStruct((B, C, N), jnp.float32),
        grid=(B, N // tn),
        in_specs=[
            pl.BlockSpec((None, tn, C), lambda b, i: (b, i, 0)),
            pl.BlockSpec((1, C), lambda b, i: (0, 0)),
            pl.BlockSpec((1, C), lambda b, i: (0, 0)),
        ],
        out_specs=pl.BlockSpec((None, C, tn), lambda b, i: (b, 0, i)),
        compiler_params=pltpu.CompilerParams(
            dimension_semantics=("parallel", "parallel"),
            vmem_limit_bytes=32 * 1024 * 1024),
    )(y, scale2d, shift2d)


# --------------------------------------------------------------------------
# Full forward (matches PointNetFeaturePropagation.forward)
# --------------------------------------------------------------------------
def pointnet_fp_forward(xyz1, xyz2, points1, points2, params):
    """xyz1 [B,C,N], xyz2 [B,C,S], points1 [B,D1,N] or None, points2 [B,D2,S]
    -> [B, mlp[-1], N]"""
    x1_t = jnp.transpose(xyz1, (0, 2, 1)).astype(jnp.float32)     # [B, N, C]
    p2_t = jnp.transpose(points2, (0, 2, 1)).astype(jnp.float32)  # [B, S, D2]
    B, N, _ = x1_t.shape
    S = xyz2.shape[2]

    if S == 1:
        interp = jnp.tile(p2_t, (1, N, 1))        # points2.repeat(1, N, 1)
    else:
        interp = interpolate(x1_t, xyz2.astype(jnp.float32), p2_t, min(KNN, S))

    if points1 is not None:
        p1_t = jnp.transpose(points1, (0, 2, 1)).astype(jnp.float32)
        feat = jnp.concatenate([p1_t, interp], axis=-1)
    else:
        feat = interp

    cnt = jnp.float32(B * N)
    cur = feat
    cin = feat.shape[-1]
    scale = jnp.ones((1, cin), jnp.float32)       # unused for the first layer
    shift = jnp.zeros((1, cin), jnp.float32)

    for li, (wt, bias, gamma, beta) in enumerate(params):
        y, stats = conv_bn_relu_stats(cur, scale, shift, wt, bias.reshape(1, -1),
                                      apply_bn_relu=(li > 0))
        s = jnp.sum(stats, axis=(0, 1))           # (2, Cout): tiny reduce in XLA
        mean = s[0] / cnt
        var = s[1] / cnt - mean * mean            # biased, training-mode BatchNorm1d
        sc = gamma / jnp.sqrt(var + BN_EPS)
        scale = sc.reshape(1, -1)
        shift = (beta - mean * sc).reshape(1, -1)
        cur = y

    # Last layer's BN + ReLU, fused with the [B,N,D'] -> [B,D',N] transpose.
    return bn_relu_transpose(cur, scale, shift)


# --------------------------------------------------------------------------
# Pure-JAX reference for validation (PyTorch semantics, f32)
# --------------------------------------------------------------------------
def reference_forward(xyz1, xyz2, points1, points2, params):
    x1 = jnp.transpose(xyz1, (0, 2, 1))
    x2 = jnp.transpose(xyz2, (0, 2, 1))
    p2 = jnp.transpose(points2, (0, 2, 1))
    B, N, _ = x1.shape
    S = x2.shape[1]
    d2 = (-2.0 * jnp.einsum("bnc,bmc->bnm", x1, x2)
          + jnp.sum(x1 ** 2, -1)[:, :, None]
          + jnp.sum(x2 ** 2, -1)[:, None, :])
    d = jnp.sqrt(jnp.maximum(d2, 0.0))
    knn = min(KNN, S)
    idx = jnp.argsort(d, axis=-1)[:, :, :knn]
    dk = jnp.take_along_axis(d, idx, axis=-1)
    recip = 1.0 / (dk + 1e-8)
    w = recip / jnp.sum(recip, axis=-1, keepdims=True)
    gathered = jax.vmap(lambda pts, ix: pts[ix])(p2, idx)     # [B, N, knn, D2]
    interp = jnp.sum(gathered * w[..., None], axis=2)
    p1 = jnp.transpose(points1, (0, 2, 1))
    feat = jnp.concatenate([p1, interp], axis=-1)
    for (wt, bias, gamma, beta) in params:
        y = jnp.einsum("bnc,cd->bnd", feat, wt) + bias
        mean = jnp.mean(y, axis=(0, 1))
        var = jnp.var(y, axis=(0, 1))
        feat = jax.nn.relu((y - mean) / jnp.sqrt(var + BN_EPS) * gamma + beta)
    return jnp.transpose(feat, (0, 2, 1))


if __name__ == "__main__":
    B, C, N, S = 2, 3, 64, 32
    D1, D2 = 8, 16
    mlp = [32, 16]
    in_channel = D1 + D2

    key = jax.random.PRNGKey(0)
    keys = jax.random.split(key, 4 + 4 * len(mlp))
    xyz1 = jax.random.normal(keys[0], (B, C, N), jnp.float32)
    xyz2 = jax.random.normal(keys[1], (B, C, S), jnp.float32)
    points1 = jax.random.normal(keys[2], (B, D1, N), jnp.float32)
    points2 = jax.random.normal(keys[3], (B, D2, S), jnp.float32)

    # Deterministic parameter init (Conv1d(kernel=1) weight [Cout, Cin], bias
    # [Cout]; BatchNorm1d gamma/beta [Cout]); weight stored pre-transposed to
    # [Cin, Cout].
    params = []
    last = in_channel
    ki = 4
    for cout in mlp:
        W = 0.1 * jax.random.normal(keys[ki], (cout, last), jnp.float32); ki += 1
        b = 0.1 * jax.random.normal(keys[ki], (cout,), jnp.float32); ki += 1
        gamma = 1.0 + 0.1 * jax.random.normal(keys[ki], (cout,), jnp.float32); ki += 1
        beta = 0.1 * jax.random.normal(keys[ki], (cout,), jnp.float32); ki += 1
        params.append((W.T, b, gamma, beta))
        last = cout

    out = pointnet_fp_forward(xyz1, xyz2, points1, points2, params)
    out = jax.block_until_ready(out)

    assert out.shape == (B, mlp[-1], N), out.shape
    assert bool(jnp.all(jnp.isfinite(out)))
    ref = reference_forward(xyz1, xyz2, points1, points2, params)
    max_err = float(jnp.max(jnp.abs(out - ref)))
    # Tolerance accounts for bf16 MXU operands (f32 accumulation) in the
    # gather and conv matmuls vs the pure-f32 reference.
    assert max_err < 5e-2, f"max abs error vs reference: {max_err}"
    print("KERNEL_OK")
</pallas_src>

<mosaic_0001>
module attributes {stable_mosaic.version = 11 : i64} {
  func.func @_interp_kernel(%arg0: i32, %arg1: i32, %arg2: memref<1x64x3xf32, #tpu.memory_space<vmem>>, %arg3: memref<1x3x32xf32, #tpu.memory_space<vmem>>, %arg4: memref<1x32x16xf32, #tpu.memory_space<vmem>>, %arg5: memref<1x64x16xf32, #tpu.memory_space<vmem>>) attributes {dimension_semantics = [#tpu.dimension_semantics<parallel>, #tpu.dimension_semantics<parallel>], iteration_bounds = array<i64: 2, 1>, scalar_prefetch = 0 : i64, scratch_operands = 0 : i64, tpu.core_type = #tpu.core_type<tc>, window_params = [{transform_indices = @transform_0, window_bounds = array<i64: 1, 64, 3>}, {transform_indices = @transform_1, window_bounds = array<i64: 1, 3, 32>}, {transform_indices = @transform_2, window_bounds = array<i64: 1, 32, 16>}, {transform_indices = @transform_3, window_bounds = array<i64: 1, 64, 16>}]} {
    %c0 = arith.constant 0 : index
    %c0_0 = arith.constant 0 : index
    %c0_1 = arith.constant 0 : index
    %0 = vector.load %arg2[%c0, %c0_0, %c0_1] : memref<1x64x3xf32, #tpu.memory_space<vmem>>, vector<1x64x3xf32>
    %1 = vector.shape_cast %0 : vector<1x64x3xf32> to vector<64x3xf32>
    %c0_2 = arith.constant 0 : index
    %c0_3 = arith.constant 0 : index
    %c0_4 = arith.constant 0 : index
    %2 = vector.load %arg3[%c0_2, %c0_3, %c0_4] : memref<1x3x32xf32, #tpu.memory_space<vmem>>, vector<1x3x32xf32>
    %3 = vector.shape_cast %2 : vector<1x3x32xf32> to vector<3x32xf32>
    %c0_5 = arith.constant 0 : index
    %c0_6 = arith.constant 0 : index
    %c0_7 = arith.constant 0 : index
    %4 = vector.load %arg4[%c0_5, %c0_6, %c0_7] : memref<1x32x16xf32, #tpu.memory_space<vmem>>, vector<1x32x16xf32>
    %5 = vector.shape_cast %4 : vector<1x32x16xf32> to vector<32x16xf32>
    %cst = arith.constant dense<0.000000e+00> : vector<64x32xf32>
    %6 = tpu.matmul %1, %3, %cst {dimension_numbers = #tpu.dot_dimension_numbers<[1], [0], [0], [1], [0, 0, 1, 1], [], []>} : vector<64x3xf32>, vector<3x32xf32>, vector<64x32xf32> -> vector<64x32xf32>
    %cst_8 = arith.constant -2.000000e+00 : f32
    %7 = vector.broadcast %cst_8 : f32 to vector<64x32xf32>
    %8 = arith.mulf %7, %6 : vector<64x32xf32>
    %9 = arith.mulf %1, %1 : vector<64x3xf32>
    %cst_9 = arith.constant dense<0.000000e+00> : vector<64xf32>
    %10 = vector.multi_reduction <add>, %9, %cst_9 [1] : vector<64x3xf32> to vector<64xf32>
    %11 = vector.shape_cast %10 : vector<64xf32> to vector<64x1xf32>
    %12 = vector.broadcast %11 : vector<64x1xf32> to vector<64x32xf32>
    %13 = arith.addf %8, %12 : vector<64x32xf32>
    %14 = arith.mulf %3, %3 : vector<3x32xf32>
    %cst_10 = arith.constant dense<0.000000e+00> : vector<32xf32>
    %15 = vector.multi_reduction <add>, %14, %cst_10 [0] : vector<3x32xf32> to vector<32xf32>
    %16 = vector.shape_cast %15 : vector<32xf32> to vector<1x32xf32>
    %17 = vector.broadcast %16 : vector<1x32xf32> to vector<64x32xf32>
    %18 = arith.addf %13, %17 : vector<64x32xf32>
    %cst_11 = arith.constant 0.000000e+00 : f32
    %19 = vector.broadcast %cst_11 : f32 to vector<64x32xf32>
    %20 = arith.maximumf %18, %19 : vector<64x32xf32>
    %cst_12 = arith.constant 0.000000e+00 : f32
    %21 = vector.broadcast %cst_12 : f32 to vector<64x1xf32>
    %c0_i32 = arith.constant 0 : i32
    %c24_i32 = arith.constant 24 : i32
    %22 = arith.addi %c0_i32, %c24_i32 : i32
    %c1_i32 = arith.constant 1 : i32
    %23:2 = scf.for %arg6 = %c0_i32 to %22 step %c1_i32 iter_args(%arg7 = %20, %arg8 = %21) -> (vector<64x32xf32>, vector<64x1xf32>)  : i32 {
      %cst_19 = arith.constant dense<0x7F800000> : vector<64xf32>
      %43 = vector.multi_reduction <minimumf>, %arg7, %cst_19 [1] : vector<64x32xf32> to vector<64xf32>
      %44 = vector.shape_cast %43 : vector<64xf32> to vector<64x1xf32>
      %45 = vector.broadcast %44 : vector<64x1xf32> to vector<64x32xf32>
      %46 = arith.cmpf ole, %arg7, %45 : vector<64x32xf32>
      %cst_20 = arith.constant 0x7F800000 : f32
      %47 = vector.broadcast %cst_20 : f32 to vector<64x32xf32>
      %48 = arith.select %46, %47, %arg7 : vector<64x32xi1>, vector<64x32xf32>
      scf.yield %48, %44 : vector<64x32xf32>, vector<64x1xf32>
    }
    %24 = vector.broadcast %23#1 : vector<64x1xf32> to vector<64x32xf32>
    %25 = arith.cmpf ole, %20, %24 : vector<64x32xf32>
    %26 = arith.extui %25 : vector<64x32xi1> to vector<64x32xi32>
    %27 = arith.sitofp %26 : vector<64x32xi32> to vector<64x32xf32>
    %cst_13 = arith.constant 1.000000e-16 : f32
    %28 = vector.broadcast %cst_13 : f32 to vector<64x32xf32>
    %29 = arith.addf %20, %28 : vector<64x32xf32>
    %30 = math.rsqrt %29 : vector<64x32xf32>
    %31 = arith.mulf %27, %30 : vector<64x32xf32>
    %cst_14 = arith.constant dense<0.000000e+00> : vector<64xf32>
    %32 = vector.multi_reduction <add>, %31, %cst_14 [1] : vector<64x32xf32> to vector<64xf32>
    %33 = vector.shape_cast %32 : vector<64xf32> to vector<64x1xf32>
    %34 = tpu.reciprocal %33 {approx = true} : vector<64x1xf32> -> vector<64x1xf32>
    %35 = vector.broadcast %34 : vector<64x1xf32> to vector<64x32xf32>
    %36 = arith.mulf %31, %35 : vector<64x32xf32>
    %37 = arith.truncf %36 : vector<64x32xf32> to vector<64x32xbf16>
    %38 = arith.truncf %5 : vector<32x16xf32> to vector<32x16xbf16>
    %cst_15 = arith.constant dense<0.000000e+00> : vector<64x16xf32>
    %39 = tpu.matmul %37, %38, %cst_15 {dimension_numbers = #tpu.dot_dimension_numbers<[1], [0], [0], [1], [0, 0, 1, 1], [], []>} : vector<64x32xbf16>, vector<32x16xbf16>, vector<64x16xf32> -> vector<64x16xf32>
    %c0_16 = arith.constant 0 : index
    %c0_17 = arith.constant 0 : index
    %c0_18 = arith.constant 0 : index
    %40 = vector.load %arg5[%c0_16, %c0_17, %c0_18] : memref<1x64x16xf32, #tpu.memory_space<vmem>>, vector<1x64x16xf32>
    %41 = vector.shape_cast %40 : vector<1x64x16xf32> to vector<64x16xf32>
    %42 = vector.shape_cast %39 : vector<64x16xf32> to vector<1x64x16xf32>
    tpu.vector_store %arg5[%c0_16, %c0_17, %c0_18], %42 {strides = array<i32>} : memref<1x64x16xf32, #tpu.memory_space<vmem>>, vector<1x64x16xf32>,
    return
  }
  func.func @transform_0(%arg0: i32, %arg1: i32) -> (i32, i32, i32) {
    %c0_i32 = arith.constant 0 : i32
    %c0_i32_0 = arith.constant 0 : i32
    return %arg0, %arg1, %c0_i32 : i32, i32, i32
  }
  func.func @transform_1(%arg0: i32, %arg1: i32) -> (i32, i32, i32) {
    %c0_i32 = arith.constant 0 : i32
    %c0_i32_0 = arith.constant 0 : i32
    %c0_i32_1 = arith.constant 0 : i32
    return %arg0, %c0_i32, %c0_i32_0 : i32, i32, i32
  }
  func.func @transform_2(%arg0: i32, %arg1: i32) -> (i32, i32, i32) {
    %c0_i32 = arith.constant 0 : i32
    %c0_i32_0 = arith.constant 0 : i32
    %c0_i32_1 = arith.constant 0 : i32
    return %arg0, %c0_i32, %c0_i32_0 : i32, i32, i32
  }
  func.func @transform_3(%arg0: i32, %arg1: i32) -> (i32, i32, i32) {
    %c0_i32 = arith.constant 0 : i32
    %c0_i32_0 = arith.constant 0 : i32
    return %arg0, %arg1, %c0_i32 : i32, i32, i32
  }
}

</mosaic_0001>

<llo_original>
// kernel: tpu_custom_call.1
$region0: #{tpu_custom_call.1}
  #allocation0 [shape = 'u32[]', space=smem, size = 0x4, offset = 0x4, fixed_abs, tag = 'smem constant byte address 0x4 - core index']
  #allocation1 [shape = 'u32[144,128]{1,0:T(1,128)}', space=vmem, size = 0x12000, scoped, tag = 'internal scratch']
  %s0 = inlined_call_operand.vmem [shape: f32[2,64,3], index: 0, kind: input, shape index: {}]
  %s1 = inlined_call_operand.vmem [shape: f32[2,3,32], index: 1, kind: input, shape index: {}]
  %s2 = inlined_call_operand.vmem [shape: f32[2,32,16], index: 2, kind: input, shape index: {}]
  %s3 = inlined_call_operand.vmem [shape: f32[2,64,16], index: 3, kind: output, shape index: {}]
  %s4 = sld [smem:[#allocation0]]
  $region52: #{tpu_custom_call.1} parent=0
    _
  %s6 = ssub.s32 1, %s4
  %s7 = scalar_select 0, %s6, %s4
  loop: start=0, step=1, limit=4
  $region2: #{tpu_custom_call.1} parent=0 // loop_pre_header
    _
  $region3: #{tpu_custom_call.1} parent=0 // loop_header
    %s9 = sphi 0, %s13
    %p10 = scmp.ge.s32.totalorder %s9, 4
    %s16 = sphi 0, %s28
    %s17 = sphi 0, %s24
    %s18 = sphi 0, %s16
    %s19 = sphi 0, %s17
    %s20 = sphi 0, %s18
    %s21 = sphi 0, %s19
    %s33 = sphi 0, %s35
    %s36 = sphi 0, %s33
    %s37 = sphi 0, %s36
    %s53 = sphi 0, %s37
    %s59 = sphi 0, %s61
    %s62 = sphi 0, %s59
    %s63 = sphi 0, %s62
    %s79 = sphi 0, %s63
    %s85 = sphi 0, %s87
    %s88 = sphi 0, %s85
    %s89 = sphi 0, %s88
    %s105 = sphi 0, %s89
    %s113 = sphi 0, %s115
    %s116 = sphi 0, %s113
    %s117 = sphi 0, %s116
    %s133 = sphi 0, %s117
  $region4: #{tpu_custom_call.1} parent=0 // loop_header_branch
    %12 = sbr.rel (%p10) target = $region8
  $region5: #{tpu_custom_call.1} parent=0 // loop_body
    %s14 = ssub.s32 %s9, 1
    %s15 = ssub.s32 %s9, 2
    %s22 = sadd.s32 1, %s17
    %p23 = scmp.ge.s32.totalorder %s22, 1
    %s24 = scalar_select %p23, 0, %s22
    %s25 = sadd.s32 1, %s16
    %s26 = scalar_select %p23, %s25, %s16
    %p27 = scmp.ge.s32.totalorder %s26, 2
    %s28 = scalar_select %p27, 0, %s26
    %s29 = ssub.s32 %s16, %s28
    %s30 = ssub.s32 %s17, %s24
    %s31 = sor.u32 %s29, %s30
    %p32 = scmp.eq.s32.totalorder %s31, 0
    %s34 = sadd.s32 %s33, 1
    %s35 = scalar_select %p32, %s33, %s34
    %p38 = pneg %p32
    %p39 = scmp.eq.s32.totalorder %s9, 1
    %p40 = por %p38, %p39
    %p41 = scmp.ne.s32.totalorder %s33, %s36
    %p42 = scmp.eq.s32.totalorder %s9, 0
    %p43 = por %p41, %p42
    %p44 = scmp.ne.s32.totalorder %s33, %s36
    %p45 = scmp.eq.s32.totalorder %s14, 1
    %p46 = por %p44, %p45
    %p47 = scmp.ne.s32.totalorder %s36, %s37
    %p48 = scmp.eq.s32.totalorder %s14, 0
    %p49 = por %p47, %p48
    %p50 = scmp.ne.s32.totalorder %s36, %s37
    %p51 = scmp.eq.s32.totalorder %s15, 1
    %p52 = por %p50, %p51
    %p54 = scmp.ne.s32.totalorder %s37, %s53
    %p55 = scmp.eq.s32.totalorder %s15, 0
    %p56 = por %p54, %p55
    %s57 = ssub.s32 %s16, %s28
    %p58 = scmp.eq.s32.totalorder %s57, 0
    %s60 = sadd.s32 %s59, 1
    %s61 = scalar_select %p58, %s59, %s60
    %p64 = pneg %p58
    %p65 = scmp.eq.s32.totalorder %s9, 1
    %p66 = por %p64, %p65
    %p67 = scmp.ne.s32.totalorder %s59, %s62
    %p68 = scmp.eq.s32.totalorder %s9, 0
    %p69 = por %p67, %p68
    %p70 = scmp.ne.s32.totalorder %s59, %s62
    %p71 = scmp.eq.s32.totalorder %s14, 1
    %p72 = por %p70, %p71
    %p73 = scmp.ne.s32.totalorder %s62, %s63
    %p74 = scmp.eq.s32.totalorder %s14, 0
    %p75 = por %p73, %p74
    %p76 = scmp.ne.s32.totalorder %s62, %s63
    %p77 = scmp.eq.s32.totalorder %s15, 1
    %p78 = por %p76, %p77
    %p80 = scmp.ne.s32.totalorder %s63, %s79
    %p81 = scmp.eq.s32.totalorder %s15, 0
    %p82 = por %p80, %p81
    %s83 = ssub.s32 %s16, %s28
    %p84 = scmp.eq.s32.totalorder %s83, 0
    %s86 = sadd.s32 %s85, 1
    %s87 = scalar_select %p84, %s85, %s86
    %p90 = pneg %p84
    %p91 = scmp.eq.s32.totalorder %s9, 1
    %p92 = por %p90, %p91
    %p93 = scmp.ne.s32.totalorder %s85, %s88
    %p94 = scmp.eq.s32.totalorder %s9, 0
    %p95 = por %p93, %p94
    %p96 = scmp.ne.s32.totalorder %s85, %s88
    %p97 = scmp.eq.s32.totalorder %s14, 1
    %p98 = por %p96, %p97
    %p99 = scmp.ne.s32.totalorder %s88, %s89
    %p100 = scmp.eq.s32.totalorder %s14, 0
    %p101 = por %p99, %p100
    %p102 = scmp.ne.s32.totalorder %s88, %s89
    %p103 = scmp.eq.s32.totalorder %s15, 1
    %p104 = por %p102, %p103
    %p106 = scmp.ne.s32.totalorder %s89, %s105
    %p107 = scmp.eq.s32.totalorder %s15, 0
    %p108 = por %p106, %p107
    %s109 = ssub.s32 %s16, %s28
    %s110 = ssub.s32 %s17, %s24
    %s111 = sor.u32 %s109, %s110
    %p112 = scmp.eq.s32.totalorder %s111, 0
    %s114 = sadd.s32 %s113, 1
    %s115 = scalar_select %p112, %s113, %s114
    %p118 = pneg %p112
    %p119 = scmp.eq.s32.totalorder %s9, 1
    %p120 = por %p118, %p119
    %p121 = scmp.ne.s32.totalorder %s113, %s116
    %p122 = scmp.eq.s32.totalorder %s9, 0
    %p123 = por %p121, %p122
    %p124 = scmp.ne.s32.totalorder %s113, %s116
    %p125 = scmp.eq.s32.totalorder %s14, 1
    %p126 = por %p124, %p125
    %p127 = scmp.ne.s32.totalorder %s116, %s117
    %p128 = scmp.eq.s32.totalorder %s14, 0
    %p129 = por %p127, %p128
    %p130 = scmp.ne.s32.totalorder %s116, %s117
    %p131 = scmp.eq.s32.totalorder %s15, 1
    %p132 = por %p130, %p131
    %p134 = scmp.ne.s32.totalorder %s117, %s133
    %p135 = scmp.eq.s32.totalorder %s15, 0
    %p136 = por %p134, %p135
    %p137 = scmp.le.s32.totalorder 1, %s9
    %p138 = scmp.lt.s32.totalorder %s9, 3
    %p139 = pnand %p137, %p138
    %p140 = pneg %p139
    // Predicated region
    $region9: #{tpu_custom_call.1} parent=5 // pred_check
      _
    $region10: #{tpu_custom_call.1} parent=5 // pred_check_branch
      %142 = sbr.rel (%p139) target = $region12
    $region11: #{tpu_custom_call.1} parent=5 // pred_region
      %s143 = ssub.s32 %s9, 1
    $region12: #{tpu_custom_call.1} parent=5 // pred_fallthru
      _
    %p144 = scmp.lt.s32.totalorder %s9, 2
    // Predicated region
    $region13: #{tpu_custom_call.1} parent=5 // pred_check
      %p145 = pneg %p144
    $region14: #{tpu_custom_call.1} parent=5 // pred_check_branch
      %147 = sbr.rel (%p145) target = $region16
    $region15: #{tpu_custom_call.1} parent=5 // pred_region
      // Predicated region
      $region17: #{tpu_custom_call.1} parent=15 // pred_check
        %p148 = pneg %p43
      $region18: #{tpu_custom_call.1} parent=15 // pred_check_branch
        %150 = sbr.rel (%p148) target = $region20
      $region19: #{tpu_custom_call.1} parent=15 // pred_region
        %s151 = smul.u32 8, %s17
        %p152 = scmp.lt.s32.totalorder %s16, 1
        %s153 = scalar_select %p152, %s16, 1
        %p154 = scmp.lt.s32.totalorder %s151, 7
        %s155 = scalar_select %p154, %s151, 7
        %s156 = smul.addr %s153, 8
        %s157 = sadd.s32 %s155, %s156
        %s158 = smul.addr %s157, 8
        %s159 = scalar_lea.vmem %s0, %s158
        %s160 = smul.u32 8, %s17
      $region20: #{tpu_custom_call.1} parent=15 // pred_fallthru
        _
      // Predicated region
      $region21: #{tpu_custom_call.1} parent=15 // pred_check
        %p161 = pneg %p69
      $region22: #{tpu_custom_call.1} parent=15 // pred_check_branch
        %163 = sbr.rel (%p161) target = $region24
      $region23: #{tpu_custom_call.1} parent=15 // pred_region
        %p164 = scmp.lt.s32.totalorder %s16, 1
        %s165 = scalar_select %p164, %s16, 1
        %s166 = smul.addr %s165, 4
        %s167 = scalar_lea.vmem %s1, %s166
      $region24: #{tpu_custom_call.1} parent=15 // pred_fallthru
        _
      // Predicated region
      $region25: #{tpu_custom_call.1} parent=15 // pred_check
        %p168 = pneg %p95
      $region26: #{tpu_custom_call.1} parent=15 // pred_check_branch
        %170 = sbr.rel (%p168) target = $region28
      $region27: #{tpu_custom_call.1} parent=15 // pred_region
        %p171 = scmp.lt.s32.totalorder %s16, 1
        %s172 = scalar_select %p171, %s16, 1
        %s173 = smul.addr %s172, 4
        %s174 = smul.addr %s173, 8
        %s175 = scalar_lea.vmem %s2, %s174
      $region28: #{tpu_custom_call.1} parent=15 // pred_fallthru
        _
    $region16: #{tpu_custom_call.1} parent=5 // pred_fallthru
      _
    %p176 = scmp.le.s32.totalorder 1, %s9
    %p177 = scmp.lt.s32.totalorder %s9, 3
    %p178 = pnand %p176, %p177
    %p179 = pneg %p178
    // Predicated region
    $region29: #{tpu_custom_call.1} parent=5 // pred_check
      _
    $region30: #{tpu_custom_call.1} parent=5 // pred_check_branch
      %181 = sbr.rel (%p178) target = $region32
    $region31: #{tpu_custom_call.1} parent=5 // pred_region
      %s182 = ssub.s32 %s9, 1
      %s183 = smul.u32 8, %s19
      %p184 = scmp.lt.s32.totalorder %s18, 1
      %s185 = scalar_select %p184, %s18, 1
      %p186 = scmp.lt.s32.totalorder %s183, 7
      %s187 = scalar_select %p186, %s183, 7
      %s188 = smul.addr %s185, 8
      %s189 = sadd.s32 %s187, %s188
      %s190 = smul.addr %s189, 8
      %s191 = scalar_lea.vmem %s0, %s190
      %p192 = pneg %p49
      %p193 = pneg %p46
      %p194 = scmp.lt.s32.totalorder %s18, 1
      %s195 = scalar_select %p194, %s18, 1
      %s196 = smul.addr %s195, 4
      %s197 = scalar_lea.vmem %s1, %s196
      %p198 = pneg %p75
      %p199 = pneg %p72
      %p200 = scmp.lt.s32.totalorder %s18, 1
      %s201 = scalar_select %p200, %s18, 1
      %s202 = smul.addr %s201, 4
      %s203 = smul.addr %s202, 8
      %s204 = scalar_lea.vmem %s2, %s203
      %p205 = pneg %p101
      %p206 = pneg %p98
      %p207 = pneg %p129
      %p208 = pneg %p126
      %s209 = smul.u32 8, %s19
      %p210 = scmp.lt.s32.totalorder %s18, 1
      %s211 = scalar_select %p210, %s18, 1
      %p212 = scmp.lt.s32.totalorder %s209, 7
      %s213 = scalar_select %p212, %s209, 7
      %s214 = smul.addr %s211, 8
      %s215 = sadd.s32 %s213, %s214
      %s216 = smul.addr %s215, 8
      %s217 = scalar_lea.vmem %s3, %s216
      %s218 = smul.u32 8, %s19
      %p219 = scmp.lt.s32.totalorder %s18, 1
      %s220 = scalar_select %p219, %s18, 1
      %p221 = scmp.lt.s32.totalorder %s218, 7
      %s222 = scalar_select %p221, %s218, 7
      %s223 = smul.addr %s220, 8
      %s224 = sadd.s32 %s222, %s223
      %s225 = smul.addr %s224, 8
      %s226 = scalar_lea.vmem %s0, %s225
      %s227 = smul.u32 8, %s19
      %p228 = scmp.lt.s32.totalorder %s18, 1
      %s229 = scalar_select %p228, %s18, 1
      %s230 = smul.addr %s229, 4
      %s231 = scalar_lea.vmem %s1, %s230
      %p232 = scmp.lt.s32.totalorder %s18, 1
      %s233 = scalar_select %p232, %s18, 1
      %s234 = smul.addr %s233, 4
      %s235 = smul.addr %s234, 8
      %s236 = scalar_lea.vmem %s2, %s235
      %s237 = smul.u32 8, %s19
      %p238 = scmp.lt.s32.totalorder %s18, 1
      %s239 = scalar_select %p238, %s18, 1
      %p240 = scmp.lt.s32.totalorder %s237, 7
      %s241 = scalar_select %p240, %s237, 7
      %s242 = smul.addr %s239, 8
      %s243 = sadd.s32 %s241, %s242
      %s244 = smul.addr %s243, 8
      %s245 = scalar_lea.vmem %s3, %s244
      %s246 = smul.u32 8, %s19
      %v248 = vld [vmem:[%s226] sm:$0xff]
      %v249 = vld [vmem:[%s226 + $0x8] sm:$0xff]
      %v250 = vld [vmem:[%s226 + $0x10] sm:$0xff]
      %v251 = vld [vmem:[%s226 + $0x18] sm:$0xff]
      %v252 = vld [vmem:[%s226 + $0x20] sm:$0xff]
      %v253 = vld [vmem:[%s226 + $0x28] sm:$0xff]
      %v254 = vld [vmem:[%s226 + $0x30] sm:$0xff]
      %v255 = vld [vmem:[%s226 + $0x38] sm:$0xff]
      %v256 = vld [vmem:[%s231] sm:$0x7]
      %v257 = vld [vmem:[%s236] sm:$0xff]
      %v258 = vld [vmem:[%s236 + $0x8] sm:$0xff]
      %v259 = vld [vmem:[%s236 + $0x10] sm:$0xff]
      %v260 = vld [vmem:[%s236 + $0x18] sm:$0xff]
      %vm261 = vcmask 23552
      %v263 = vsel %vm261, %v248, 0
      %v266 = vsel %vm261, %v249, 0
      %v269 = vsel %vm261, %v250, 0
      %v272 = vsel %vm261, %v251, 0
      %v275 = vsel %vm261, %v252, 0
      %v278 = vsel %vm261, %v253, 0
      %v281 = vsel %vm261, %v254, 0
      %v284 = vsel %vm261, %v255, 0
      %vm286 = vcmask 1042432
      %v288 = vsel %vm286, %v256, 0
      %290 = vmatprep.subr.mxu0 0.0
      %291 = vmatpush1.msra.mxu0 %v288
      %292 = vmatprep.subr.mxu0 0.0
      %293 = vmatpush1.msra.mxu0 0.0
      %294 = vmatprep.subr.mxu0 0.0
      %295 = vmatpush1.msra.mxu0 0.0
      %296 = vmatprep.subr.mxu0 0.0
      %297 = vmatpush1.msra.mxu0 0.0
      %298 = vmatprep.subr.mxu0 0.0
      %299 = vmatpush1.msra.mxu0 0.0
      %300 = vmatprep.subr.mxu0 0.0
      %301 = vmatpush1.msra.mxu0 0.0
      %302 = vmatprep.subr.mxu0 0.0
      %303 = vmatpush1.msra.mxu0 0.0
      %304 = vmatprep.subr.mxu0 0.0
      %305 = vmatpush1.msra.mxu0 0.0
      %306 = vmatprep.subr.mxu0 0.0
      %307 = vmatpush1.msra.mxu0 0.0
      %308 = vmatprep.subr.mxu0 0.0
      %309 = vmatpush1.msra.mxu0 0.0
      %310 = vmatprep.subr.mxu0 0.0
      %311 = vmatpush1.msra.mxu0 0.0
      %312 = vmatprep.subr.mxu0 0.0
      %313 = vmatpush1.msra.mxu0 0.0
      %314 = vmatprep.subr.mxu0 0.0
      %315 = vmatpush1.msra.mxu0 0.0
      %316 = vmatprep.subr.mxu0 0.0
      %317 = vmatpush1.msra.mxu0 0.0
      %318 = vmatprep.subr.mxu0 0.0
      %319 = vmatpush1.msra.mxu0 0.0
      %320 = vmatprep.subr.mxu0 0.0
      %321 = vmatpush1.msra.mxu0 0.0
      %322 = vmatprep.subr.mxu0 0.0
      %323 = vmatpush1.msra.mxu0 0.0
      %324 = vmatprep.subr.mxu0 0.0
      %325 = vmatpush1.msra.mxu0 0.0
      %326 = vmatprep.subr.mxu0 0.0
      %327 = vmatpush1.msra.mxu0 0.0
      %328 = vmatprep.subr.mxu0 0.0
      %329 = vmatpush1.msra.mxu0 0.0
      %330 = vmatprep.subr.mxu0 0.0
      %331 = vmatpush1.msra.mxu0 0.0
      %332 = vmatprep.subr.mxu0 0.0
      %333 = vmatpush1.msra.mxu0 0.0
      %334 = vmatprep.subr.mxu0 0.0
      %335 = vmatpush1.msra.mxu0 0.0
      %336 = vmatprep.subr.mxu0 0.0
      %337 = vmatpush1.msra.mxu0 0.0
      %338 = vmatprep.subr.mxu0 0.0
      %339 = vmatpush1.msra.mxu0 0.0
      %340 = vmatprep.subr.mxu0 0.0
      %341 = vmatpush1.msra.mxu0 0.0
      %342 = vmatprep.subr.mxu0 0.0
      %343 = vmatpush1.msra.mxu0 0.0
      %344 = vmatprep.subr.mxu0 0.0
      %345 = vmatpush1.msra.mxu0 0.0
      %346 = vmatprep.subr.mxu0 0.0
      %347 = vmatpush1.msra.mxu0 0.0
      %348 = vmatprep.subr.mxu0 0.0
      %349 = vmatpush1.msra.mxu0 0.0
      %350 = vmatprep.subr.mxu0 0.0
      %351 = vmatpush1.msra.mxu0 0.0
      %352 = vmatprep.subr.mxu0 0.0
      %353 = vmatpush1.msra.mxu0 0.0
      %354 = vmatprep.mubr.f32.mxu0 0.0
      %355 = vmatmul.mubr.f32.gmra.mrb[0].mxu0 %v263
      %v356 = vpop.f32.mrb[0].mxu0
      %v357 = vadd.f32 0.0, %v356
      %v358 = vpop.f32.mrb[0].mxu0
      %359 = vmatprep.mubr.f32.mxu0 0.0
      %360 = vmatmul.mubr.f32.gmra.mrb[0].mxu0 %v266
      %v361 = vpop.f32.mrb[0].mxu0
      %v362 = vadd.f32 0.0, %v361
      %v363 = vpop.f32.mrb[0].mxu0
      %364 = vmatprep.mubr.f32.mxu0 0.0
      %365 = vmatmul.mubr.f32.gmra.mrb[0].mxu0 %v269
      %v366 = vpop.f32.mrb[0].mxu0
      %v367 = vadd.f32 0.0, %v366
      %v368 = vpop.f32.mrb[0].mxu0
      %369 = vmatprep.mubr.f32.mxu0 0.0
      %370 = vmatmul.mubr.f32.gmra.mrb[0].mxu0 %v272
      %v371 = vpop.f32.mrb[0].mxu0
      %v372 = vadd.f32 0.0, %v371
      %v373 = vpop.f32.mrb[0].mxu0
      %374 = vmatprep.mubr.f32.mxu0 0.0
      %375 = vmatmul.mubr.f32.gmra.mrb[0].mxu0 %v275
      %v376 = vpop.f32.mrb[0].mxu0
      %v377 = vadd.f32 0.0, %v376
      %v378 = vpop.f32.mrb[0].mxu0
      %379 = vmatprep.mubr.f32.mxu0 0.0
      %380 = vmatmul.mubr.f32.gmra.mrb[0].mxu0 %v278
      %v381 = vpop.f32.mrb[0].mxu0
      %v382 = vadd.f32 0.0, %v381
      %v383 = vpop.f32.mrb[0].mxu0
      %384 = vmatprep.mubr.f32.mxu0 0.0
      %385 = vmatmul.mubr.f32.gmra.mrb[0].mxu0 %v281
      %v386 = vpop.f32.mrb[0].mxu0
      %v387 = vadd.f32 0.0, %v386
      %v388 = vpop.f32.mrb[0].mxu0
      %389 = vmatprep.mubr.f32.mxu0 0.0
      %390 = vmatmul.mubr.f32.gmra.mrb[0].mxu0 %v284
      %v391 = vpop.f32.mrb[0].mxu0
      %v392 = vadd.f32 0.0, %v391
      %v393 = vpop.f32.mrb[0].mxu0
      %394 = vdwg.mxu0
      %v395 = vmul.f32 %v357, -2.0
      %v396 = vmul.f32 %v362, -2.0
      %v397 = vmul.f32 %v367, -2.0
      %v398 = vmul.f32 %v372, -2.0
      %v399 = vmul.f32 %v377, -2.0
      %v400 = vmul.f32 %v382, -2.0
      %v401 = vmul.f32 %v387, -2.0
      %v402 = vmul.f32 %v392, -2.0
      %v403 = vmul.f32 %v248, %v248
      %v404 = vmul.f32 %v249, %v249
      %v405 = vmul.f32 %v250, %v250
      %v406 = vmul.f32 %v251, %v251
      %v407 = vmul.f32 %v252, %v252
      %v408 = vmul.f32 %v253, %v253
      %v409 = vmul.f32 %v254, %v254
      %v410 = vmul.f32 %v255, %v255
      %v411 = vsel %vm261, %v403, 0.0
      %412 = vadd.xlane.f32.xlu0 %v411
      %v413 = vpop.xlane.xlu0 %412
      %v414 = vsel %vm261, %v404, 0.0
      %415 = vadd.xlane.f32.xlu0 %v414
      %v416 = vpop.xlane.xlu0 %415
      %v417 = vsel %vm261, %v405, 0.0
      %418 = vadd.xlane.f32.xlu0 %v417
      %v419 = vpop.xlane.xlu0 %418
      %v420 = vsel %vm261, %v406, 0.0
      %421 = vadd.xlane.f32.xlu0 %v420
      %v422 = vpop.xlane.xlu0 %421
      %v423 = vsel %vm261, %v407, 0.0
      %424 = vadd.xlane.f32.xlu0 %v423
      %v425 = vpop.xlane.xlu0 %424
      %v426 = vsel %vm261, %v408, 0.0
      %427 = vadd.xlane.f32.xlu0 %v426
      %v428 = vpop.xlane.xlu0 %427
      %v429 = vsel %vm261, %v409, 0.0
      %430 = vadd.xlane.f32.xlu0 %v429
      %v431 = vpop.xlane.xlu0 %430
      %v432 = vsel %vm261, %v410, 0.0
      %433 = vadd.xlane.f32.xlu0 %v432
      %v434 = vpop.xlane.xlu0 %433
      %v435 = vadd.f32 %v395, %v413
      %v436 = vadd.f32 %v396, %v416
      %v437 = vadd.f32 %v397, %v419
      %v438 = vadd.f32 %v398, %v422
      %v439 = vadd.f32 %v399, %v425
      %v440 = vadd.f32 %v400, %v428
      %v441 = vadd.f32 %v401, %v431
      %v442 = vadd.f32 %v402, %v434
      %v443 = vmul.f32 %v256, %v256
      %vm444 = vcmask 256000
      %v445 = vsel %vm444, %v443, 0.0
      %v446 = vrot.slane %v445, 4
      %v447 = vadd.f32 %v445, %v446
      %v448 = vrot.slane %v447, 2
      %v449 = vadd.f32 %v447, %v448
      %v450 = vrot.slane %v449, 1
      %v451 = vadd.f32 %v449, %v450
      %v452 = vadd.f32 %v435, %v451
      %v453 = vadd.f32 %v436, %v451
      %v454 = vadd.f32 %v437, %v451
      %v455 = vadd.f32 %v438, %v451
      %v456 = vadd.f32 %v439, %v451
      %v457 = vadd.f32 %v440, %v451
      %v458 = vadd.f32 %v441, %v451
      %v459 = vadd.f32 %v442, %v451
      %v460 = vmax.f32 %v452, 0.0
      %v461 = vmax.f32 %v453, 0.0
      %v462 = vmax.f32 %v454, 0.0
      %v463 = vmax.f32 %v455, 0.0
      %v464 = vmax.f32 %v456, 0.0
      %v465 = vmax.f32 %v457, 0.0
      %v466 = vmax.f32 %v458, 0.0
      %v467 = vmax.f32 %v459, 0.0
      loop: start=0, step=1, limit=24
      $region33: #{tpu_custom_call.1} parent=31 // loop_pre_header
        _
      $region34: #{tpu_custom_call.1} parent=31 // loop_header
        %s469 = sphi 0, %s473
        %p470 = scmp.ge.s32.totalorder %s469, 24
        %v474 = vphi %v460, %v523
        %v475 = vphi %v461, %v524
        %v476 = vphi %v462, %v525
        %v477 = vphi %v463, %v526
        %v478 = vphi %v464, %v527
        %v479 = vphi %v465, %v528
        %v480 = vphi %v466, %v529
        %v481 = vphi %v467, %v530
        %v482 = vphi 0.0, %v493
        %v483 = vphi 0.0, %v496
        %v484 = vphi 0.0, %v499
        %v485 = vphi 0.0, %v502
        %v486 = vphi 0.0, %v505
        %v487 = vphi 0.0, %v508
        %v488 = vphi 0.0, %v511
        %v489 = vphi 0.0, %v514
      $region35: #{tpu_custom_call.1} parent=31 // loop_header_branch
        %472 = sbr.rel (%p470) target = $region39
      $region36: #{tpu_custom_call.1} parent=31 // loop_body
        %vm490 = vcmask 261120
        %v491 = vsel %vm490, %v474, inf
        %492 = vmin.xlane.f32.xlu0 %v491
        %v493 = vpop.xlane.xlu0 %492
        %v494 = vsel %vm490, %v475, inf
        %495 = vmin.xlane.f32.xlu0 %v494
        %v496 = vpop.xlane.xlu0 %495
        %v497 = vsel %vm490, %v476, inf
        %498 = vmin.xlane.f32.xlu0 %v497
        %v499 = vpop.xlane.xlu0 %498
        %v500 = vsel %vm490, %v477, inf
        %501 = vmin.xlane.f32.xlu0 %v500
        %v502 = vpop.xlane.xlu0 %501
        %v503 = vsel %vm490, %v478, inf
        %504 = vmin.xlane.f32.xlu0 %v503
        %v505 = vpop.xlane.xlu0 %504
        %v506 = vsel %vm490, %v479, inf
        %507 = vmin.xlane.f32.xlu0 %v506
        %v508 = vpop.xlane.xlu0 %507
        %v509 = vsel %vm490, %v480, inf
        %510 = vmin.xlane.f32.xlu0 %v509
        %v511 = vpop.xlane.xlu0 %510
        %v512 = vsel %vm490, %v481, inf
        %513 = vmin.xlane.f32.xlu0 %v512
        %v514 = vpop.xlane.xlu0 %513
        %vm515 = vcmp.le.f32.partialorder %v474, %v493
        %vm516 = vcmp.le.f32.partialorder %v475, %v496
        %vm517 = vcmp.le.f32.partialorder %v476, %v499
        %vm518 = vcmp.le.f32.partialorder %v477, %v502
        %vm519 = vcmp.le.f32.partialorder %v478, %v505
        %vm520 = vcmp.le.f32.partialorder %v479, %v508
        %vm521 = vcmp.le.f32.partialorder %v480, %v511
        %vm522 = vcmp.le.f32.partialorder %v481, %v514
        %v523 = vsel %vm515, inf, %v474
        %v524 = vsel %vm516, inf, %v475
        %v525 = vsel %vm517, inf, %v476
        %v526 = vsel %vm518, inf, %v477
        %v527 = vsel %vm519, inf, %v478
        %v528 = vsel %vm520, inf, %v479
        %v529 = vsel %vm521, inf, %v480
        %v530 = vsel %vm522, inf, %v481
      $region37: #{tpu_custom_call.1} parent=31 // loop_footer
        %s473 = sadd.s32 1, %s469
      $region38: #{tpu_custom_call.1} parent=31 // loop_footer_branch
        %468 = sbr.rel target = $region34
      $region39: #{tpu_custom_call.1} parent=31 // loop_exit
        _
      %vm531 = vcmp.le.f32.partialorder %v460, %v482
      %vm532 = vcmp.le.f32.partialorder %v461, %v483
      %vm533 = vcmp.le.f32.partialorder %v462, %v484
      %vm534 = vcmp.le.f32.partialorder %v463, %v485
      %vm535 = vcmp.le.f32.partialorder %v464, %v486
      %vm536 = vcmp.le.f32.partialorder %v465, %v487
      %vm537 = vcmp.le.f32.partialorder %v466, %v488
      %vm538 = vcmp.le.f32.partialorder %v467, %v489
      %v539 = vsel %vm531, 1, 0
      %v540 = vsel %vm532, 1, 0
      %v541 = vsel %vm533, 1, 0
      %v542 = vsel %vm534, 1, 0
      %v543 = vsel %vm535, 1, 0
      %v544 = vsel %vm536, 1, 0
      %v545 = vsel %vm537, 1, 0
      %v546 = vsel %vm538, 1, 0
      %v547 = vcvt.s32.f32 %v539
      %v548 = vcvt.s32.f32 %v540
      %v549 = vcvt.s32.f32 %v541
      %v550 = vcvt.s32.f32 %v542
      %v551 = vcvt.s32.f32 %v543
      %v552 = vcvt.s32.f32 %v544
      %v553 = vcvt.s32.f32 %v545
      %v554 = vcvt.s32.f32 %v546
      %v555 = vadd.f32 %v460, 1e-16
      %v556 = vadd.f32 %v461, 1e-16
      %v557 = vadd.f32 %v462, 1e-16
      %v558 = vadd.f32 %v463, 1e-16
      %v559 = vadd.f32 %v464, 1e-16
      %v560 = vadd.f32 %v465, 1e-16
      %v561 = vadd.f32 %v466, 1e-16
      %v562 = vadd.f32 %v467, 1e-16
      %v563 = vrsqrt.pop %v555
      %v564 = vrsqrt.pop %v556
      %v565 = vrsqrt.pop %v557
      %v566 = vrsqrt.pop %v558
      %v567 = vrsqrt.pop %v559
      %v568 = vrsqrt.pop %v560
      %v569 = vrsqrt.pop %v561
      %v570 = vrsqrt.pop %v562
      %v571 = vmul.f32 %v547, %v563
      %v572 = vmul.f32 %v548, %v564
      %v573 = vmul.f32 %v549, %v565
      %v574 = vmul.f32 %v550, %v566
      %v575 = vmul.f32 %v551, %v567
      %v576 = vmul.f32 %v552, %v568
      %v577 = vmul.f32 %v553, %v569
      %v578 = vmul.f32 %v554, %v570
      %vm579 = vcmask 261120
      %v580 = vsel %vm579, %v571, 0.0
      %581 = vadd.xlane.f32.xlu0 %v580
      %v582 = vpop.xlane.xlu0 %581
      %v583 = vsel %vm579, %v572, 0.0
      %584 = vadd.xlane.f32.xlu0 %v583
      %v585 = vpop.xlane.xlu0 %584
      %v586 = vsel %vm579, %v573, 0.0
      %587 = vadd.xlane.f32.xlu0 %v586
      %v588 = vpop.xlane.xlu0 %587
      %v589 = vsel %vm579, %v574, 0.0
      %590 = vadd.xlane.f32.xlu0 %v589
      %v591 = vpop.xlane.xlu0 %590
      %v592 = vsel %vm579, %v575, 0.0
      %593 = vadd.xlane.f32.xlu0 %v592
      %v594 = vpop.xlane.xlu0 %593
      %v595 = vsel %vm579, %v576, 0.0
      %596 = vadd.xlane.f32.xlu0 %v595
      %v597 = vpop.xlane.xlu0 %596
      %v598 = vsel %vm579, %v577, 0.0
      %599 = vadd.xlane.f32.xlu0 %v598
      %v600 = vpop.xlane.xlu0 %599
      %v601 = vsel %vm579, %v578, 0.0
      %602 = vadd.xlane.f32.xlu0 %v601
      %v603 = vpop.xlane.xlu0 %602
      %v604 = vrcp.pop %v582
      %v605 = vrcp.pop %v585
      %v606 = vrcp.pop %v588
      %v607 = vrcp.pop %v591
      %v608 = vrcp.pop %v594
      %v609 = vrcp.pop %v597
      %v610 = vrcp.pop %v600
      %v611 = vrcp.pop %v603
      %v612 = vmul.f32 %v571, %v604
      %v613 = vmul.f32 %v572, %v605
      %v614 = vmul.f32 %v573, %v606
      %v615 = vmul.f32 %v574, %v607
      %v616 = vmul.f32 %v575, %v608
      %v617 = vmul.f32 %v576, %v609
      %v618 = vmul.f32 %v577, %v610
      %v619 = vmul.f32 %v578, %v611
      %v620 = vpack.c.bf16 %v613, %v612
      %v621 = vpack.c.bf16 %v615, %v614
      %v622 = vpack.c.bf16 %v617, %v616
      %v623 = vpack.c.bf16 %v619, %v618
      %v624 = vpack.c.bf16 %v258, %v257
      %v625 = vpack.c.bf16 %v260, %v259
      %v627 = vsel %vm579, %v620, 0
      %v630 = vsel %vm579, %v621, 0
      %v633 = vsel %vm579, %v622, 0
      %v636 = vsel %vm579, %v623, 0
      %638 = vmatprep.subr.bf16.mxu0 0
      %639 = vmatpush1.bf16.msra.mxu0 %v624
      %640 = vmatprep.subr.bf16.mxu0 0
      %641 = vmatpush1.bf16.msra.mxu0 %v625
      %642 = vmatprep.subr.bf16.mxu0 0
      %643 = vmatpush1.bf16.msra.mxu0 0
      %644 = vmatprep.subr.bf16.mxu0 0
      %645 = vmatpush1.bf16.msra.mxu0 0
      %646 = vmatprep.subr.bf16.mxu0 0
      %647 = vmatpush1.bf16.msra.mxu0 0
      %648 = vmatprep.subr.bf16.mxu0 0
      %649 = vmatpush1.bf16.msra.mxu0 0
      %650 = vmatprep.subr.bf16.mxu0 0
      %651 = vmatpush1.bf16.msra.mxu0 0
      %652 = vmatprep.subr.bf16.mxu0 0
      %653 = vmatpush1.bf16.msra.mxu0 0
      %654 = vmatprep.subr.bf16.mxu0 0
      %655 = vmatpush1.bf16.msra.mxu0 0
      %656 = vmatprep.subr.bf16.mxu0 0
      %657 = vmatpush1.bf16.msra.mxu0 0
      %658 = vmatprep.subr.bf16.mxu0 0
      %659 = vmatpush1.bf16.msra.mxu0 0
      %660 = vmatprep.subr.bf16.mxu0 0
      %661 = vmatpush1.bf16.msra.mxu0 0
      %662 = vmatprep.subr.bf16.mxu0 0
      %663 = vmatpush1.bf16.msra.mxu0 0
      %664 = vmatprep.subr.bf16.mxu0 0
      %665 = vmatpush1.bf16.msra.mxu0 0
      %666 = vmatprep.subr.bf16.mxu0 0
      %667 = vmatpush1.bf16.msra.mxu0 0
      %668 = vmatprep.subr.bf16.mxu0 0
      %669 = vmatpush1.bf16.msra.mxu0 0
      %670 = vmatprep.mubr.bf16.mxu0 0
      %671 = vmatmul.mubr.bf16.gmra.mrb[0].mxu0 %v627
      %v672 = vpop.f32.mrb[0].mxu0
      %v673 = vadd.f32 0.0, %v672
      %v674 = vpop.f32.mrb[0].mxu0
      %v675 = vpop.f32.mrb[0].mxu0
      %v676 = vadd.f32 0.0, %v675
      %v677 = vpop.f32.mrb[0].mxu0
      %678 = vmatprep.mubr.bf16.mxu0 0
      %679 = vmatmul.mubr.bf16.gmra.mrb[0].mxu0 %v630
      %v680 = vpop.f32.mrb[0].mxu0
      %v681 = vadd.f32 0.0, %v680
      %v682 = vpop.f32.mrb[0].mxu0
      %v683 = vpop.f32.mrb[0].mxu0
      %v684 = vadd.f32 0.0, %v683
      %v685 = vpop.f32.mrb[0].mxu0
      %686 = vmatprep.mubr.bf16.mxu0 0
      %687 = vmatmul.mubr.bf16.gmra.mrb[0].mxu0 %v633
      %v688 = vpop.f32.mrb[0].mxu0
      %v689 = vadd.f32 0.0, %v688
      %v690 = vpop.f32.mrb[0].mxu0
      %v691 = vpop.f32.mrb[0].mxu0
      %v692 = vadd.f32 0.0, %v691
      %v693 = vpop.f32.mrb[0].mxu0
      %694 = vmatprep.mubr.bf16.mxu0 0
      %695 = vmatmul.mubr.bf16.gmra.mrb[0].mxu0 %v636
      %v696 = vpop.f32.mrb[0].mxu0
      %v697 = vadd.f32 0.0, %v696
      %v698 = vpop.f32.mrb[0].mxu0
      %v699 = vpop.f32.mrb[0].mxu0
      %v700 = vadd.f32 0.0, %v699
      %v701 = vpop.f32.mrb[0].mxu0
      %702 = vdwg.mxu0
      %vm703 = vcmask 130048
      %704 = vst.msk [vmem:[%s245] sm:$0xff] %vm703, %v673
      %705 = vst.msk [vmem:[%s245 + $0x8] sm:$0xff] %vm703, %v676
      %706 = vst.msk [vmem:[%s245 + $0x10] sm:$0xff] %vm703, %v681
      %707 = vst.msk [vmem:[%s245 + $0x18] sm:$0xff] %vm703, %v684
      %708 = vst.msk [vmem:[%s245 + $0x20] sm:$0xff] %vm703, %v689
      %709 = vst.msk [vmem:[%s245 + $0x28] sm:$0xff] %vm703, %v692
      %710 = vst.msk [vmem:[%s245 + $0x30] sm:$0xff] %vm703, %v697
      %711 = vst.msk [vmem:[%s245 + $0x38] sm:$0xff] %vm703, %v700
      %s712 = smul.u32 8, %s19
      %p713 = scmp.lt.s32.totalorder %s18, 1
      %s714 = scalar_select %p713, %s18, 1
      %p715 = scmp.lt.s32.totalorder %s712, 7
      %s716 = scalar_select %p715, %s712, 7
      %s717 = smul.addr %s714, 8
      %s718 = sadd.s32 %s716, %s717
      %s719 = smul.addr %s718, 8
      %s720 = scalar_lea.vmem %s3, %s719
      // Predicated region
      $region40: #{tpu_custom_call.1} parent=31 // pred_check
        %p721 = pneg %p126
      $region41: #{tpu_custom_call.1} parent=31 // pred_check_branch
        %723 = sbr.rel (%p721) target = $region43
      $region42: #{tpu_custom_call.1} parent=31 // pred_region
        %s724 = smul.u32 8, %s19
      $region43: #{tpu_custom_call.1} parent=31 // pred_fallthru
        _
    $region32: #{tpu_custom_call.1} parent=5 // pred_fallthru
      _
    %p725 = scmp.le.s32.totalorder 2, %s9
    // Predicated region
    $region44: #{tpu_custom_call.1} parent=5 // pred_check
      %p726 = pneg %p725
    $region45: #{tpu_custom_call.1} parent=5 // pred_check_branch
      %728 = sbr.rel (%p726) target = $region47
    $region46: #{tpu_custom_call.1} parent=5 // pred_region
      %s729 = ssub.s32 %s9, 2
      // Predicated region
      $region48: #{tpu_custom_call.1} parent=46 // pred_check
        %p730 = pneg %p132
      $region49: #{tpu_custom_call.1} parent=46 // pred_check_branch
        %732 = sbr.rel (%p730) target = $region51
      $region50: #{tpu_custom_call.1} parent=46 // pred_region
        %s733 = smul.u32 8, %s21
        %p734 = scmp.lt.s32.totalorder %s20, 1
        %s735 = scalar_select %p734, %s20, 1
        %p736 = scmp.lt.s32.totalorder %s733, 7
        %s737 = scalar_select %p736, %s733, 7
        %s738 = smul.addr %s735, 8
        %s739 = sadd.s32 %s737, %s738
        %s740 = smul.addr %s739, 8
        %s741 = scalar_lea.vmem %s3, %s740
      $region51: #{tpu_custom_call.1} parent=46 // pred_fallthru
        _
    $region47: #{tpu_custom_call.1} parent=5 // pred_fallthru
      _
  $region6: #{tpu_custom_call.1} parent=0 // loop_footer
    %s13 = sadd.s32 1, %s9
  $region7: #{tpu_custom_call.1} parent=0 // loop_footer_branch
    %8 = sbr.rel target = $region3
  $region8: #{tpu_custom_call.1} parent=0 // loop_exit
    _

</llo_original>
